<compile_context>
chip_gen: v5e
topology: v5e:2x2
jax: 0.10.0
libtpu: 0.0.40
codegen_flags: <defaults>
</compile_context>

<pallas_src>
import functools

import jax
import jax.numpy as jnp
import numpy as np
from jax import lax
from jax.experimental import pallas as pl
from jax.experimental.pallas import tpu as pltpu


# ----------------------------- small helpers ---------------------------------
def _round_up(x, m):
    return ((x + m - 1) // m) * m


def _pick_tile(n, max_tile):
    """Largest multiple of 128 that divides n and is <= max_tile; else n (full dim)."""
    t = (min(max_tile, n) // 128) * 128
    while t >= 128:
        if n % t == 0:
            return t
        t -= 128
    return n


def _softplus(x):
    # f32 math (v5e has no bf16 VPU/EUP); log1p/exp go to the EUP slot.
    return jnp.maximum(x, 0.0) + jnp.log1p(jnp.exp(-jnp.abs(x)))


def _sigmoid_eup(x):
    # numerically stable sigmoid; denominator via EUP approx reciprocal.
    e = jnp.exp(-jnp.abs(x))
    inv = pl.reciprocal(1.0 + e, approx=True)
    return jnp.where(x >= 0, inv, e * inv)


def _parallel(n):
    return pltpu.CompilerParams(dimension_semantics=("parallel",) * n)


_ARBITRARY = pltpu.CompilerParams(dimension_semantics=("arbitrary",))


# ----------------------------- generic linear kernel -------------------------
# Batch is tiny (M<=8) so these linears are pure weight-DMA bound: weights are
# pre-cast to bf16 once at init, activations cast bf16 in the wrapper.
def _linear_kernel(x_ref, w_ref, b_ref, o_ref):
    o_ref[...] = (
        jnp.dot(x_ref[...], w_ref[...], preferred_element_type=jnp.float32)
        + b_ref[...]
    )


def pallas_linear(x, w_bf16, b, tile_n=4096):
    M, K = x.shape
    Kw, N = w_bf16.shape
    assert K == Kw
    Mp = _round_up(M, 8)
    xp = jnp.pad(x, ((0, Mp - M), (0, 0))).astype(jnp.bfloat16)
    tn = _pick_tile(N, tile_n)
    out = pl.pallas_call(
        _linear_kernel,
        out_shape=jax.ShapeDtypeStruct((Mp, N), jnp.float32),
        grid=(N // tn,),
        in_specs=[
            pl.BlockSpec((Mp, K), lambda j: (0, 0)),
            pl.BlockSpec((K, tn), lambda j: (0, j)),
            pl.BlockSpec((1, tn), lambda j: (0, j)),
        ],
        out_specs=pl.BlockSpec((Mp, tn), lambda j: (0, j)),
        compiler_params=_parallel(1),
    )(xp, w_bf16, b.reshape(1, N))
    return out[:M]


# ----------------------------- fused plane synthesis --------------------------
# plane = z_id @ W_g + z_motion @ W_mp + (b_g + b_mp + canonical_plane)
# canonical plane is folded into the bias on the host (one fewer input stream).
def _plane_fused_kernel(zi_ref, zm_ref, wg_ref, wmp_ref, b_ref, o_ref):
    acc = jnp.dot(zi_ref[...], wg_ref[...], preferred_element_type=jnp.float32)
    acc = acc + jnp.dot(zm_ref[...], wmp_ref[...], preferred_element_type=jnp.float32)
    o_ref[...] = acc + b_ref[...]


def pallas_plane_fused(z_id, z_motion, Wg_bf16, Wmp_bf16, b_total, tile_n=6144):
    M, Kg = z_id.shape
    _, Km = z_motion.shape
    N = Wg_bf16.shape[1]
    assert Wmp_bf16.shape[1] == N and b_total.shape == (1, N)
    Mp = _round_up(M, 8)
    zi = jnp.pad(z_id, ((0, Mp - M), (0, 0))).astype(jnp.bfloat16)
    zm = jnp.pad(z_motion, ((0, Mp - M), (0, 0))).astype(jnp.bfloat16)
    tn = _pick_tile(N, tile_n)
    out = pl.pallas_call(
        _plane_fused_kernel,
        out_shape=jax.ShapeDtypeStruct((Mp, N), jnp.float32),
        grid=(N // tn,),
        in_specs=[
            pl.BlockSpec((Mp, Kg), lambda j: (0, 0)),
            pl.BlockSpec((Mp, Km), lambda j: (0, 0)),
            pl.BlockSpec((Kg, tn), lambda j: (0, j)),
            pl.BlockSpec((Km, tn), lambda j: (0, j)),
            pl.BlockSpec((1, tn), lambda j: (0, j)),
        ],
        out_specs=pl.BlockSpec((Mp, tn), lambda j: (0, j)),
        compiler_params=_parallel(1),
    )(zi, zm, Wg_bf16, Wmp_bf16, b_total)
    return out[:M]


# ----------------------------- OSGDecoder kernel (lane-dense) -----------------
# Points on the 128-lane axis: x (C, tile) bf16 -> h (H, tile) -> y (Dout, tile).
# Row 0 of the output is raw sigma, rows 1: are sigmoid-activated rgb features.
def _osg_decoder_kernel(x_ref, w1t_ref, b1_ref, w2t_ref, b2_ref, o_ref):
    x = x_ref[...]                                             # (C, tile) bf16
    h = jnp.dot(w1t_ref[...], x, preferred_element_type=jnp.float32) + b1_ref[...]
    h = _softplus(h)
    y = jnp.dot(w2t_ref[...], h.astype(jnp.bfloat16),
                preferred_element_type=jnp.float32) + b2_ref[...]
    rgb_all = _sigmoid_eup(y) * (1.0 + 2 * 0.001) - 0.001
    row = lax.broadcasted_iota(jnp.int32, y.shape, 0)
    o_ref[...] = jnp.where(row == 0, y, rgb_all)               # row 0: raw sigma


def osg_decoder_raw(features, params, tile_max=4096):
    """features: (N, C, pts) f32 -> (N, 1+dec_out, pts) f32 (lane-dense on pts)."""
    w1t, b1, w2t, b2 = params                                  # bf16 / f32, pre-transposed
    N, C, pts = features.shape
    H = w1t.shape[0]
    Dout = w2t.shape[0]
    tile = _pick_tile(pts, tile_max)
    x = features.astype(jnp.bfloat16)                          # halve the dominant DMA
    return pl.pallas_call(
        _osg_decoder_kernel,
        out_shape=jax.ShapeDtypeStruct((N, Dout, pts), jnp.float32),
        grid=(N, pts // tile),
        in_specs=[
            pl.BlockSpec((None, C, tile), lambda n, i: (n, 0, i)),
            pl.BlockSpec((H, C), lambda n, i: (0, 0)),
            pl.BlockSpec((H, 1), lambda n, i: (0, 0)),
            pl.BlockSpec((Dout, H), lambda n, i: (0, 0)),
            pl.BlockSpec((Dout, 1), lambda n, i: (0, 0)),
        ],
        out_specs=pl.BlockSpec((None, Dout, tile), lambda n, i: (n, 0, i)),
        compiler_params=_parallel(2),
    )(x, w1t, b1, w2t, b2)


# ----------------------------- volume-rendering compositing (lane-dense) ------
# Consumes the decoder output directly (no XLA transposes): dec (N, Dout, D, M),
# rays on lanes.  Per-depth ref indexing keeps the live vreg set small.
def _composite_kernel(dec_ref, o_ref, *, depths, deltas):
    Dout, D, tile = dec_ref.shape
    Cf = Dout - 1
    T = jnp.ones((1, tile), jnp.float32)
    acc_f = jnp.zeros((Cf, tile), jnp.float32)
    acc_d = jnp.zeros((1, tile), jnp.float32)
    acc_w = jnp.zeros((1, tile), jnp.float32)
    for i in range(D):                                         # static unroll, D small
        y = dec_ref[:, i, :]                                   # (Dout, tile) per-depth load
        dens = _softplus(y[0:1, :] - 1.0)                      # clamp_mode == 'softplus'
        t_next = T * jnp.exp(-dens * deltas[i])
        w = T - t_next                                         # = alpha * T
        acc_f = acc_f + w * y[1:, :]
        acc_d = acc_d + w * depths[i]
        acc_w = acc_w + w
        T = t_next
    o_ref[0:Cf, :] = acc_f
    o_ref[Cf:Cf + 1, :] = acc_d
    o_ref[Cf + 1:Cf + 2, :] = acc_w


def pallas_composite(dec4, depths, deltas, tile_max=2048):
    """dec4: (N, Dout, D, M) -> (N, Dout-1+2, M) = [features, depth, weight_sum]."""
    N, Dout, D, M = dec4.shape
    Cf = Dout - 1
    tile = _pick_tile(M, tile_max)
    kernel = functools.partial(_composite_kernel, depths=depths, deltas=deltas)
    return pl.pallas_call(
        kernel,
        out_shape=jax.ShapeDtypeStruct((N, Cf + 2, M), jnp.float32),
        grid=(N, M // tile),
        in_specs=[pl.BlockSpec((None, Dout, D, tile), lambda n, i: (n, 0, 0, i))],
        out_specs=pl.BlockSpec((None, Cf + 2, tile), lambda n, i: (n, 0, i)),
        compiler_params=_parallel(2),
    )(dec4)


# ----------------------------- MSE (TV loss) reduction ------------------------
def _mse_kernel(a_ref, b_ref, o_ref, acc_ref):
    @pl.when(pl.program_id(0) == 0)
    def _():
        acc_ref[...] = jnp.zeros_like(acc_ref)

    d = a_ref[...] - b_ref[...]
    acc_ref[...] += d * d

    @pl.when(pl.program_id(0) == pl.num_programs(0) - 1)
    def _():
        o_ref[0, 0] = jnp.sum(acc_ref[...])


def pallas_mse(a, b, cols=512, row_tile=512):
    a2 = a.reshape(-1).astype(jnp.float32)
    b2 = b.reshape(-1).astype(jnp.float32)
    n = a2.shape[0]
    rows = _round_up(pl.cdiv(n, cols), 8)
    row_tile = min(row_tile, rows)
    rows_p = _round_up(rows, row_tile)
    total = rows_p * cols
    a2 = jnp.pad(a2, (0, total - n)).reshape(rows_p, cols)
    b2 = jnp.pad(b2, (0, total - n)).reshape(rows_p, cols)
    out = pl.pallas_call(
        _mse_kernel,
        out_shape=jax.ShapeDtypeStruct((1, 1), jnp.float32),
        grid=(rows_p // row_tile,),
        in_specs=[
            pl.BlockSpec((row_tile, cols), lambda i: (i, 0)),
            pl.BlockSpec((row_tile, cols), lambda i: (i, 0)),
        ],
        out_specs=pl.BlockSpec((1, 1), lambda i: (0, 0),
                               memory_space=pltpu.MemorySpace.SMEM),
        scratch_shapes=[pltpu.VMEM((row_tile, cols), jnp.float32)],
        compiler_params=_ARBITRARY,
    )(a2, b2)
    return out[0, 0] / n


# ----------------------------- JAX glue (no clean Pallas equivalent) ----------
def ray_sampler(cam2world, intrinsics, resolution):
    # TODO(synk): RaySampler source not provided; pinhole-camera approximation.
    fx, fy = intrinsics[:, 0, 0], intrinsics[:, 1, 1]
    cx, cy = intrinsics[:, 0, 2], intrinsics[:, 1, 2]
    uv = (jnp.arange(resolution, dtype=jnp.float32) + 0.5) / resolution
    vg, ug = jnp.meshgrid(uv, uv, indexing="ij")
    u, v = ug.reshape(-1), vg.reshape(-1)
    x_cam = (u[None, :] - cx[:, None]) / fx[:, None]
    y_cam = (v[None, :] - cy[:, None]) / fy[:, None]
    z_cam = jnp.ones_like(x_cam)
    dirs = jnp.stack([x_cam, y_cam, z_cam], axis=-1)
    dirs = dirs / jnp.linalg.norm(dirs, axis=-1, keepdims=True)
    dirs_world = jnp.einsum("nij,nmj->nmi", cam2world[:, :3, :3], dirs)
    origins = jnp.broadcast_to(cam2world[:, None, :3, 3], dirs_world.shape)
    return origins, dirs_world


def sample_from_planes_mean(planes, coords, box_warp):
    # TODO(synk): grid_sample-style bilinear gather has no clean Pallas equivalent -> JAX glue.
    # Emits (N, C, pts) directly (points lane-dense) so the decoder needs no transpose,
    # and the 3-plane mean is fused so the decoder reads each point's features once.
    N, n_planes, C, P, _ = planes.shape
    coords = (2.0 / box_warp) * coords
    x, y, z = coords[..., 0], coords[..., 1], coords[..., 2]
    proj = jnp.stack([jnp.stack([x, y], -1),
                      jnp.stack([x, z], -1),
                      jnp.stack([z, y], -1)], axis=1)          # (N, 3, pts, 2)

    def sample_one(plane, uv):                                 # plane (C,P,P), uv (pts,2)
        px = (uv[:, 0] + 1.0) * 0.5 * P - 0.5
        py = (uv[:, 1] + 1.0) * 0.5 * P - 0.5
        x0f, y0f = jnp.floor(px), jnp.floor(py)
        wx, wy = px - x0f, py - y0f
        x0 = jnp.clip(x0f, 0, P - 1).astype(jnp.int32)
        x1 = jnp.clip(x0f + 1, 0, P - 1).astype(jnp.int32)
        y0 = jnp.clip(y0f, 0, P - 1).astype(jnp.int32)
        y1 = jnp.clip(y0f + 1, 0, P - 1).astype(jnp.int32)
        v00, v01 = plane[:, y0, x0], plane[:, y0, x1]
        v10, v11 = plane[:, y1, x0], plane[:, y1, x1]
        return (v00 * (1 - wx) * (1 - wy) + v01 * wx * (1 - wy)
                + v10 * (1 - wx) * wy + v11 * wx * wy)         # (C, pts)

    feats = jax.vmap(jax.vmap(sample_one))(planes, proj)       # (N, 3, C, pts)
    return feats.mean(axis=1)                                  # (N, C, pts)


def nearest_resize(x, out_h, out_w):
    # torch.nn.functional.interpolate default mode='nearest', NCHW.
    N, C, H, W = x.shape
    ih = (jnp.arange(out_h) * H // out_h).astype(jnp.int32)
    iw = (jnp.arange(out_w) * W // out_w).astype(jnp.int32)
    return x[:, :, ih[:, None], iw[None, :]]


# ----------------------------- Generator --------------------------------------
class GeneratorPallas:
    def __init__(self, key, *, img_size=16, style_dim=32, plane_c=8, plane_size=32,
                 decoder_hidden=16, decoder_out_dim=8, depth_resolution=12,
                 coarse_points=100):
        self.style = style_dim
        self.C = plane_c
        self.P = plane_size
        self.D = depth_resolution
        self.dec_out = decoder_out_dim
        self.n_coarse = coarse_points
        self.ray_start, self.ray_end, self.box_warp = 2.25, 3.3, 1.0

        img_feat = 3 * img_size * img_size
        plane_feat = 3 * plane_c * plane_size * plane_size
        keys = jax.random.split(key, 7)

        def fc_init(k, fin, fout):
            # StyleGAN FullyConnectedLayer (lr_multiplier=1): W ~ N(0,1)/sqrt(fin), b = 0
            return (jax.random.normal(k, (fin, fout), jnp.float32) / jnp.sqrt(fin),
                    jnp.zeros((fout,), jnp.float32))

        # Matmul weights stored bf16 once (weight-DMA bound linears); biases stay f32.
        W_e, self.b_e = fc_init(keys[0], img_feat, 2 * style_dim)        # Encoder_id stand-in
        W_g, b_g = fc_init(keys[1], style_dim, plane_feat)               # SynthesisNetwork stand-in
        W_mp, b_mp = fc_init(keys[2], 2 * style_dim, plane_feat)         # Plane_motion_field (plane head)
        W_mz, self.b_mz = fc_init(keys[3], 2 * style_dim, style_dim)     # Plane_motion_field (z_exp head)
        self.W_e = W_e.astype(jnp.bfloat16)
        self.W_g = W_g.astype(jnp.bfloat16)
        self.W_mp = W_mp.astype(jnp.bfloat16)
        self.W_mz = W_mz.astype(jnp.bfloat16)

        canonical_plane = jax.random.normal(
            keys[6], (1, 3, plane_c, plane_size, plane_size), jnp.float32)
        # Original does an in-place `planes += canonical_plane` that is visible to BOTH
        # the render and sample_mixed paths, so folding it into the plane bias is exact.
        self.b_plane = (b_g + b_mp + canonical_plane.reshape(-1)).reshape(1, -1)

        w1, b1 = fc_init(keys[4], plane_c, decoder_hidden)
        w2, b2 = fc_init(keys[5], decoder_hidden, 1 + decoder_out_dim)
        self.decoder_params = (w1.T.astype(jnp.bfloat16), b1.reshape(-1, 1),
                               w2.T.astype(jnp.bfloat16), b2.reshape(-1, 1))

    # ---- ImportanceRenderer.run_model (coarse pass only), sigma-only path ----
    def sample_sigma(self, planes, coordinates):
        feats = sample_from_planes_mean(planes, coordinates, self.box_warp)  # (N, C, pts)
        dec = osg_decoder_raw(feats, self.decoder_params)                    # (N, Dout, pts)
        return dec[:, 0, :]                                                  # raw sigma (N, pts)

    # ---- Volume_Rendering.forward (canonical plane already folded into planes) ----
    def render(self, c, planes, nerf_size):
        N = planes.shape[0]
        cam2world = c[:, :16].reshape(-1, 4, 4)
        intrinsics = c[:, 16:25].reshape(-1, 3, 3)
        ray_o, ray_d = ray_sampler(cam2world, intrinsics, nerf_size)     # (N, M, 3)
        M = ray_o.shape[1]

        t_np = np.linspace(self.ray_start, self.ray_end, self.D)
        deltas_np = np.append(np.diff(t_np), t_np[-1] - t_np[-2])
        t = jnp.asarray(t_np, jnp.float32)

        # depth-major sample points: (N, D, M, 3) so the decoder output feeds the
        # compositor with a free reshape (no XLA transpose round-trips).
        pts = ray_o[:, None, :, :] + ray_d[:, None, :, :] * t[None, :, None, None]
        coords = pts.reshape(N, self.D * M, 3)
        # TODO(synk): importance-sampling (second) pass of ImportanceRenderer is omitted.
        feats = sample_from_planes_mean(planes, coords, self.box_warp)   # (N, C, D*M)
        dec = osg_decoder_raw(feats, self.decoder_params)                # (N, Dout, D*M)
        dec4 = dec.reshape(N, 1 + self.dec_out, self.D, M)

        comp = pallas_composite(dec4,
                                tuple(float(v) for v in t_np),
                                tuple(float(v) for v in deltas_np))      # (N, C+2, M)
        Cf = self.dec_out
        H = W = nerf_size
        feature_image = comp[:, :Cf, :].reshape(N, Cf, H, W)
        depth_image = comp[:, Cf:Cf + 1, :].reshape(N, 1, H, W)
        feature_image = nearest_resize(feature_image, 128, 128)
        depth_image = nearest_resize(depth_image, 128, 128)
        rgb_image = feature_image[:, :3]
        return {"image_128": rgb_image, "image_depth": depth_image,
                "feature_image": feature_image}

    # ---- Generator.forward ----
    def forward(self, img_source_0, img_target_256, camera_target, nerf_size, rng):
        bs = img_source_0.shape[0]
        imgs = jnp.concatenate([img_source_0, img_target_256], axis=0)   # NCHW
        z = pallas_linear(imgs.reshape(imgs.shape[0], -1), self.W_e, self.b_e)
        z_id = z[:bs, :self.style]
        z_motion = jnp.concatenate([z[:bs, self.style:], z[bs:, self.style:]], axis=1)
        z_exp = pallas_linear(z_motion, self.W_mz, self.b_mz)

        # plane = G_tri_plane(z_id) + motion_field(z_motion) + canonical_plane
        # (canonical folded into the bias; single fused Pallas kernel).
        plane = pallas_plane_fused(z_id, z_motion, self.W_g, self.W_mp, self.b_plane)
        plane = plane.reshape(bs, 3, self.C, self.P, self.P)

        img_d = self.render(camera_target, plane, nerf_size)

        ws = jnp.concatenate([z_id, z_exp], axis=1)
        k1, k2, _k3 = jax.random.split(rng, 3)
        initial = jax.random.uniform(k1, (ws.shape[0], self.n_coarse, 3), jnp.float32) * 2.0 - 1.0
        perturbed = initial + jax.random.normal(k2, initial.shape, jnp.float32) * 0.004
        all_coords = jnp.concatenate([initial, perturbed], axis=1)
        sigma = self.sample_sigma(plane, all_coords)             # directions unused by OSGDecoder
        half = sigma.shape[1] // 2
        tv_loss = pallas_mse(sigma[:, :half], sigma[:, half:])
        return img_d, ws, tv_loss


# ----------------------------- main --------------------------------------------
if __name__ == "__main__":
    key = jax.random.PRNGKey(0)
    k_param, k_src, k_tgt, k_rng = jax.random.split(key, 4)

    bs = 2
    img_size = 16
    nerf_size = 8

    gen = GeneratorPallas(k_param, img_size=img_size)

    img_source_0 = jax.random.normal(k_src, (bs, 3, img_size, img_size), jnp.float32)
    img_target_256 = jax.random.normal(k_tgt, (bs, 3, img_size, img_size), jnp.float32)

    cam2world = jnp.array([[1., 0., 0., 0.],
                           [0., -1., 0., 0.],
                           [0., 0., -1., 2.7],
                           [0., 0., 0., 1.]], jnp.float32)
    intr = jnp.array([[4.26, 0., 0.5],
                      [0., 4.26, 0.5],
                      [0., 0., 1.]], jnp.float32)
    camera_target = jnp.tile(
        jnp.concatenate([cam2world.reshape(-1), intr.reshape(-1)])[None], (bs, 1))

    img_d, ws_out, tv_loss = gen.forward(img_source_0, img_target_256,
                                         camera_target, nerf_size, k_rng)
    jax.block_until_ready((img_d, ws_out, tv_loss))

    assert img_d["image_128"].shape == (bs, 3, 128, 128)
    assert img_d["image_depth"].shape == (bs, 1, 128, 128)
    assert img_d["feature_image"].shape == (bs, gen.dec_out, 128, 128)
    assert ws_out.shape == (bs, 2 * gen.style)
    assert tv_loss.shape == ()
    print("KERNEL_OK")
</pallas_src>

<mosaic_0001>
module attributes {stable_mosaic.version = 11 : i64} {
  func.func @_linear_kernel(%arg0: i32, %arg1: memref<8x768xbf16, #tpu.memory_space<vmem>>, %arg2: memref<768x64xbf16, #tpu.memory_space<vmem>>, %arg3: memref<1x64xf32, #tpu.memory_space<vmem>>, %arg4: memref<8x64xf32, #tpu.memory_space<vmem>>) attributes {dimension_semantics = [#tpu.dimension_semantics<parallel>], iteration_bounds = array<i64: 1>, scalar_prefetch = 0 : i64, scratch_operands = 0 : i64, tpu.core_type = #tpu.core_type<tc>, window_params = [{pipeline_mode = #tpu.pipeline_mode<synchronous>, transform_indices = @transform_0, window_bounds = array<i64: 8, 768>}, {transform_indices = @transform_1, window_bounds = array<i64: 768, 64>}, {transform_indices = @transform_2, window_bounds = array<i64: 1, 64>}, {transform_indices = @transform_3, window_bounds = array<i64: 8, 64>}]} {
    %c0 = arith.constant 0 : index
    %c0_0 = arith.constant 0 : index
    %0 = vector.load %arg1[%c0, %c0_0] : memref<8x768xbf16, #tpu.memory_space<vmem>>, vector<8x768xbf16>
    %c0_1 = arith.constant 0 : index
    %c0_2 = arith.constant 0 : index
    %1 = vector.load %arg2[%c0_1, %c0_2] : memref<768x64xbf16, #tpu.memory_space<vmem>>, vector<768x64xbf16>
    %cst = arith.constant dense<0.000000e+00> : vector<8x64xf32>
    %2 = tpu.matmul %0, %1, %cst {dimension_numbers = #tpu.dot_dimension_numbers<[1], [0], [0], [1], [0, 0, 1, 1], [], []>} : vector<8x768xbf16>, vector<768x64xbf16>, vector<8x64xf32> -> vector<8x64xf32>
    %c0_3 = arith.constant 0 : index
    %c0_4 = arith.constant 0 : index
    %3 = vector.load %arg3[%c0_3, %c0_4] : memref<1x64xf32, #tpu.memory_space<vmem>>, vector<1x64xf32>
    %4 = vector.broadcast %3 : vector<1x64xf32> to vector<8x64xf32>
    %5 = arith.addf %2, %4 : vector<8x64xf32>
    %c0_5 = arith.constant 0 : index
    %c0_6 = arith.constant 0 : index
    %6 = vector.load %arg4[%c0_5, %c0_6] : memref<8x64xf32, #tpu.memory_space<vmem>>, vector<8x64xf32>
    tpu.vector_store %arg4[%c0_5, %c0_6], %5 {strides = array<i32>} : memref<8x64xf32, #tpu.memory_space<vmem>>, vector<8x64xf32>,
    return
  }
  func.func @transform_0(%arg0: i32) -> (i32, i32) {
    %c0_i32 = arith.constant 0 : i32
    %c0_i32_0 = arith.constant 0 : i32
    %c0_i32_1 = arith.constant 0 : i32
    return %c0_i32, %c0_i32_0 : i32, i32
  }
  func.func @transform_1(%arg0: i32) -> (i32, i32) {
    %c0_i32 = arith.constant 0 : i32
    %c0_i32_0 = arith.constant 0 : i32
    return %c0_i32, %arg0 : i32, i32
  }
  func.func @transform_2(%arg0: i32) -> (i32, i32) {
    %c0_i32 = arith.constant 0 : i32
    %c0_i32_0 = arith.constant 0 : i32
    return %c0_i32, %arg0 : i32, i32
  }
  func.func @transform_3(%arg0: i32) -> (i32, i32) {
    %c0_i32 = arith.constant 0 : i32
    %c0_i32_0 = arith.constant 0 : i32
    return %c0_i32, %arg0 : i32, i32
  }
}

</mosaic_0001>

<llo_original>
// kernel: tpu_custom_call.1
$region0: #{tpu_custom_call.1}
  #allocation0 [shape = 'u32[]', space=smem, size = 0x4, offset = 0x4, fixed_abs, tag = 'smem constant byte address 0x4 - core index']
  #allocation1 [shape = 'u32[72,128]{1,0:T(1,128)}', space=vmem, size = 0x9000, scoped, tag = 'internal scratch']
  %s0 = inlined_call_operand.vmem [shape: bf16[8,768], index: 0, kind: input, shape index: {}]
  %s1 = inlined_call_operand.vmem [shape: bf16[768,64], index: 1, kind: input, shape index: {}]
  %s2 = inlined_call_operand.vmem [shape: f32[1,64], index: 2, kind: input, shape index: {}]
  %s3 = inlined_call_operand.hbm [shape: f32[8,64], index: 3, kind: output, shape index: {}]
  %s4 = sld [smem:[#allocation0]]
  $region22: #{tpu_custom_call.1} parent=0
    _
  %s6 = ssub.s32 1, %s4
  %s7 = scalar_select 0, %s6, %s4
  $region1: #{tpu_custom_call.1} parent=0
    #allocation2 [shape = 'u8[4096]{0}', space=vmem, size = 0x1000, scoped, tag = 'output window, operand 0, single buffered']
    #allocation3 [shape = 's32[1]{0}', space=sflag, size = 0x4, scoped, tag = 'scoped memory for tpu_custom_call.1']
    %8 = vsyncpa [#allocation3], 0
    // Predicated region
    $region2: #{tpu_custom_call.1} parent=1 // pred_check
      _
    $region3: #{tpu_custom_call.1} parent=1 // pred_check_branch
      %10 = sbr.rel (0) target = $region5
    $region4: #{tpu_custom_call.1} parent=1 // pred_region
      _
    $region5: #{tpu_custom_call.1} parent=1 // pred_fallthru
      _
    // Predicated region
    $region6: #{tpu_custom_call.1} parent=1 // pred_check
      _
    $region7: #{tpu_custom_call.1} parent=1 // pred_check_branch
      %12 = sbr.rel (0) target = $region9
    $region8: #{tpu_custom_call.1} parent=1 // pred_region
      _
    $region9: #{tpu_custom_call.1} parent=1 // pred_fallthru
      _
    // Predicated region
    $region10: #{tpu_custom_call.1} parent=1 // pred_check
      _
    $region11: #{tpu_custom_call.1} parent=1 // pred_check_branch
      %14 = sbr.rel (0) target = $region13
    $region12: #{tpu_custom_call.1} parent=1 // pred_region
      _
    $region13: #{tpu_custom_call.1} parent=1 // pred_fallthru
      _
    %v15 = vld [vmem:[%s0] sm:$0xff]
    %v16 = vld [vmem:[%s0 + $0x8] sm:$0xff]
    %v17 = vld [vmem:[%s0 + $0x10] sm:$0xff]
    %v18 = vld [vmem:[%s1] sm:$0xf]
    %v19 = vld [vmem:[%s1 + $0x4] sm:$0xf]
    %v20 = vld [vmem:[%s1 + $0x8] sm:$0xf]
    %v21 = vld [vmem:[%s1 + $0xc] sm:$0xf]
    %v22 = vld [vmem:[%s1 + $0x10] sm:$0xf]
    %v23 = vld [vmem:[%s1 + $0x14] sm:$0xf]
    %v24 = vld [vmem:[%s1 + $0x18] sm:$0xf]
    %v25 = vld [vmem:[%s1 + $0x1c] sm:$0xf]
    %v26 = vld [vmem:[%s1 + $0x20] sm:$0xf]
    %v27 = vld [vmem:[%s1 + $0x24] sm:$0xf]
    %v28 = vld [vmem:[%s1 + $0x28] sm:$0xf]
    %v29 = vld [vmem:[%s1 + $0x2c] sm:$0xf]
    %v30 = vld [vmem:[%s1 + $0x30] sm:$0xf]
    %v31 = vld [vmem:[%s1 + $0x34] sm:$0xf]
    %v32 = vld [vmem:[%s1 + $0x38] sm:$0xf]
    %v33 = vld [vmem:[%s1 + $0x3c] sm:$0xf]
    %v34 = vld [vmem:[%s1 + $0x40] sm:$0xf]
    %v35 = vld [vmem:[%s1 + $0x44] sm:$0xf]
    %v36 = vld [vmem:[%s1 + $0x48] sm:$0xf]
    %v37 = vld [vmem:[%s1 + $0x4c] sm:$0xf]
    %v38 = vld [vmem:[%s1 + $0x50] sm:$0xf]
    %v39 = vld [vmem:[%s1 + $0x54] sm:$0xf]
    %v40 = vld [vmem:[%s1 + $0x58] sm:$0xf]
    %v41 = vld [vmem:[%s1 + $0x5c] sm:$0xf]
    %v42 = vld [vmem:[%s1 + $0x60] sm:$0xf]
    %v43 = vld [vmem:[%s1 + $0x64] sm:$0xf]
    %v44 = vld [vmem:[%s1 + $0x68] sm:$0xf]
    %v45 = vld [vmem:[%s1 + $0x6c] sm:$0xf]
    %v46 = vld [vmem:[%s1 + $0x70] sm:$0xf]
    %v47 = vld [vmem:[%s1 + $0x74] sm:$0xf]
    %v48 = vld [vmem:[%s1 + $0x78] sm:$0xf]
    %v49 = vld [vmem:[%s1 + $0x7c] sm:$0xf]
    %v50 = vld [vmem:[%s1 + $0x80] sm:$0xf]
    %v51 = vld [vmem:[%s1 + $0x84] sm:$0xf]
    %v52 = vld [vmem:[%s1 + $0x88] sm:$0xf]
    %v53 = vld [vmem:[%s1 + $0x8c] sm:$0xf]
    %v54 = vld [vmem:[%s1 + $0x90] sm:$0xf]
    %v55 = vld [vmem:[%s1 + $0x94] sm:$0xf]
    %v56 = vld [vmem:[%s1 + $0x98] sm:$0xf]
    %v57 = vld [vmem:[%s1 + $0x9c] sm:$0xf]
    %v58 = vld [vmem:[%s1 + $0xa0] sm:$0xf]
    %v59 = vld [vmem:[%s1 + $0xa4] sm:$0xf]
    %v60 = vld [vmem:[%s1 + $0xa8] sm:$0xf]
    %v61 = vld [vmem:[%s1 + $0xac] sm:$0xf]
    %v62 = vld [vmem:[%s1 + $0xb0] sm:$0xf]
    %v63 = vld [vmem:[%s1 + $0xb4] sm:$0xf]
    %v64 = vld [vmem:[%s1 + $0xb8] sm:$0xf]
    %v65 = vld [vmem:[%s1 + $0xbc] sm:$0xf]
    %v66 = vld [vmem:[%s1 + $0xc0] sm:$0xf]
    %v67 = vld [vmem:[%s1 + $0xc4] sm:$0xf]
    %v68 = vld [vmem:[%s1 + $0xc8] sm:$0xf]
    %v69 = vld [vmem:[%s1 + $0xcc] sm:$0xf]
    %v70 = vld [vmem:[%s1 + $0xd0] sm:$0xf]
    %v71 = vld [vmem:[%s1 + $0xd4] sm:$0xf]
    %v72 = vld [vmem:[%s1 + $0xd8] sm:$0xf]
    %v73 = vld [vmem:[%s1 + $0xdc] sm:$0xf]
    %v74 = vld [vmem:[%s1 + $0xe0] sm:$0xf]
    %v75 = vld [vmem:[%s1 + $0xe4] sm:$0xf]
    %v76 = vld [vmem:[%s1 + $0xe8] sm:$0xf]
    %v77 = vld [vmem:[%s1 + $0xec] sm:$0xf]
    %v78 = vld [vmem:[%s1 + $0xf0] sm:$0xf]
    %v79 = vld [vmem:[%s1 + $0xf4] sm:$0xf]
    %v80 = vld [vmem:[%s1 + $0xf8] sm:$0xf]
    %v81 = vld [vmem:[%s1 + $0xfc] sm:$0xf]
    %v82 = vld [vmem:[%s1 + $0x100] sm:$0xf]
    %v83 = vld [vmem:[%s1 + $0x104] sm:$0xf]
    %v84 = vld [vmem:[%s1 + $0x108] sm:$0xf]
    %v85 = vld [vmem:[%s1 + $0x10c] sm:$0xf]
    %v86 = vld [vmem:[%s1 + $0x110] sm:$0xf]
    %v87 = vld [vmem:[%s1 + $0x114] sm:$0xf]
    %v88 = vld [vmem:[%s1 + $0x118] sm:$0xf]
    %v89 = vld [vmem:[%s1 + $0x11c] sm:$0xf]
    %v90 = vld [vmem:[%s1 + $0x120] sm:$0xf]
    %v91 = vld [vmem:[%s1 + $0x124] sm:$0xf]
    %v92 = vld [vmem:[%s1 + $0x128] sm:$0xf]
    %v93 = vld [vmem:[%s1 + $0x12c] sm:$0xf]
    %v94 = vld [vmem:[%s1 + $0x130] sm:$0xf]
    %v95 = vld [vmem:[%s1 + $0x134] sm:$0xf]
    %v96 = vld [vmem:[%s1 + $0x138] sm:$0xf]
    %v97 = vld [vmem:[%s1 + $0x13c] sm:$0xf]
    %v98 = vld [vmem:[%s1 + $0x140] sm:$0xf]
    %v99 = vld [vmem:[%s1 + $0x144] sm:$0xf]
    %v100 = vld [vmem:[%s1 + $0x148] sm:$0xf]
    %v101 = vld [vmem:[%s1 + $0x14c] sm:$0xf]
    %v102 = vld [vmem:[%s1 + $0x150] sm:$0xf]
    %v103 = vld [vmem:[%s1 + $0x154] sm:$0xf]
    %v104 = vld [vmem:[%s1 + $0x158] sm:$0xf]
    %v105 = vld [vmem:[%s1 + $0x15c] sm:$0xf]
    %v106 = vld [vmem:[%s1 + $0x160] sm:$0xf]
    %v107 = vld [vmem:[%s1 + $0x164] sm:$0xf]
    %v108 = vld [vmem:[%s1 + $0x168] sm:$0xf]
    %v109 = vld [vmem:[%s1 + $0x16c] sm:$0xf]
    %v110 = vld [vmem:[%s1 + $0x170] sm:$0xf]
    %v111 = vld [vmem:[%s1 + $0x174] sm:$0xf]
    %v112 = vld [vmem:[%s1 + $0x178] sm:$0xf]
    %v113 = vld [vmem:[%s1 + $0x17c] sm:$0xf]
    %v114 = vld [vmem:[%s2] sm:$0x1]
    %v116 = vperm.slane %v114, 0
    %v121 = vunpack.c.l.b16 %v15
    %v122 = vunpack.c.h.b16 %v15
    %v123 = vunpack.c.l.b16 %v16
    %v124 = vunpack.c.h.b16 %v16
    %v125 = vunpack.c.l.b16 %v17
    %v126 = vunpack.c.h.b16 %v17
    %v127 = vpack.c.b16 %v121, %v121
    %v128 = vpack.c.b16 %v122, %v122
    %v129 = vpack.c.b16 %v123, %v123
    %v130 = vpack.c.b16 %v124, %v124
    %v131 = vpack.c.b16 %v125, %v125
    %v132 = vpack.c.b16 %v126, %v126
    %v235 = vunpack.c.l.b16 %v18
    %v236 = vunpack.c.l.b16 %v19
    %v237 = vunpack.c.l.b16 %v20
    %v238 = vunpack.c.l.b16 %v21
    %v239 = vunpack.c.l.b16 %v22
    %v240 = vunpack.c.l.b16 %v23
    %v241 = vunpack.c.l.b16 %v24
    %v242 = vunpack.c.l.b16 %v25
    %v243 = vunpack.c.l.b16 %v26
    %v244 = vunpack.c.l.b16 %v27
    %v245 = vunpack.c.l.b16 %v28
    %v246 = vunpack.c.l.b16 %v29
    %v247 = vunpack.c.l.b16 %v30
    %v248 = vunpack.c.l.b16 %v31
    %v249 = vunpack.c.l.b16 %v32
    %v250 = vunpack.c.l.b16 %v33
    %v251 = vunpack.c.l.b16 %v34
    %v252 = vunpack.c.l.b16 %v35
    %v253 = vunpack.c.l.b16 %v36
    %v254 = vunpack.c.l.b16 %v37
    %v255 = vunpack.c.l.b16 %v38
    %v256 = vunpack.c.l.b16 %v39
    %v257 = vunpack.c.l.b16 %v40
    %v258 = vunpack.c.l.b16 %v41
    %v259 = vunpack.c.l.b16 %v42
    %v260 = vunpack.c.l.b16 %v43
    %v261 = vunpack.c.l.b16 %v44
    %v262 = vunpack.c.l.b16 %v45
    %v263 = vunpack.c.l.b16 %v46
    %v264 = vunpack.c.l.b16 %v47
    %v265 = vunpack.c.l.b16 %v48
    %v266 = vunpack.c.l.b16 %v49
    %v267 = vunpack.c.l.b16 %v50
    %v268 = vunpack.c.l.b16 %v51
    %v269 = vunpack.c.l.b16 %v52
    %v270 = vunpack.c.l.b16 %v53
    %v271 = vunpack.c.l.b16 %v54
    %v272 = vunpack.c.l.b16 %v55
    %v273 = vunpack.c.l.b16 %v56
    %v274 = vunpack.c.l.b16 %v57
    %v275 = vunpack.c.l.b16 %v58
    %v276 = vunpack.c.l.b16 %v59
    %v277 = vunpack.c.l.b16 %v60
    %v278 = vunpack.c.l.b16 %v61
    %v279 = vunpack.c.l.b16 %v62
    %v280 = vunpack.c.l.b16 %v63
    %v281 = vunpack.c.l.b16 %v64
    %v282 = vunpack.c.l.b16 %v65
    %v283 = vunpack.c.l.b16 %v66
    %v284 = vunpack.c.l.b16 %v67
    %v285 = vunpack.c.l.b16 %v68
    %v286 = vunpack.c.l.b16 %v69
    %v287 = vunpack.c.l.b16 %v70
    %v288 = vunpack.c.l.b16 %v71
    %v289 = vunpack.c.l.b16 %v72
    %v290 = vunpack.c.l.b16 %v73
    %v291 = vunpack.c.l.b16 %v74
    %v292 = vunpack.c.l.b16 %v75
    %v293 = vunpack.c.l.b16 %v76
    %v294 = vunpack.c.l.b16 %v77
    %v295 = vunpack.c.l.b16 %v78
    %v296 = vunpack.c.l.b16 %v79
    %v297 = vunpack.c.l.b16 %v80
    %v298 = vunpack.c.l.b16 %v81
    %v299 = vunpack.c.l.b16 %v82
    %v300 = vunpack.c.l.b16 %v83
    %v301 = vunpack.c.l.b16 %v84
    %v302 = vunpack.c.l.b16 %v85
    %v303 = vunpack.c.l.b16 %v86
    %v304 = vunpack.c.l.b16 %v87
    %v305 = vunpack.c.l.b16 %v88
    %v306 = vunpack.c.l.b16 %v89
    %v307 = vunpack.c.l.b16 %v90
    %v308 = vunpack.c.l.b16 %v91
    %v309 = vunpack.c.l.b16 %v92
    %v310 = vunpack.c.l.b16 %v93
    %v311 = vunpack.c.l.b16 %v94
    %v312 = vunpack.c.l.b16 %v95
    %v313 = vunpack.c.l.b16 %v96
    %v314 = vunpack.c.l.b16 %v97
    %v315 = vunpack.c.l.b16 %v98
    %v316 = vunpack.c.l.b16 %v99
    %v317 = vunpack.c.l.b16 %v100
    %v318 = vunpack.c.l.b16 %v101
    %v319 = vunpack.c.l.b16 %v102
    %v320 = vunpack.c.l.b16 %v103
    %v321 = vunpack.c.l.b16 %v104
    %v322 = vunpack.c.l.b16 %v105
    %v323 = vunpack.c.l.b16 %v106
    %v324 = vunpack.c.l.b16 %v107
    %v325 = vunpack.c.l.b16 %v108
    %v326 = vunpack.c.l.b16 %v109
    %v327 = vunpack.c.l.b16 %v110
    %v328 = vunpack.c.l.b16 %v111
    %v329 = vunpack.c.l.b16 %v112
    %v330 = vunpack.c.l.b16 %v113
    %v331 = vpack.c.b16 %v236, %v235
    %v332 = vpack.c.b16 %v238, %v237
    %v333 = vpack.c.b16 %v240, %v239
    %v334 = vpack.c.b16 %v242, %v241
    %v335 = vpack.c.b16 %v244, %v243
    %v336 = vpack.c.b16 %v246, %v245
    %v337 = vpack.c.b16 %v248, %v247
    %v338 = vpack.c.b16 %v250, %v249
    %v339 = vpack.c.b16 %v252, %v251
    %v340 = vpack.c.b16 %v254, %v253
    %v341 = vpack.c.b16 %v256, %v255
    %v342 = vpack.c.b16 %v258, %v257
    %v343 = vpack.c.b16 %v260, %v259
    %v344 = vpack.c.b16 %v262, %v261
    %v345 = vpack.c.b16 %v264, %v263
    %v346 = vpack.c.b16 %v266, %v265
    %v347 = vpack.c.b16 %v268, %v267
    %v348 = vpack.c.b16 %v270, %v269
    %v349 = vpack.c.b16 %v272, %v271
    %v350 = vpack.c.b16 %v274, %v273
    %v351 = vpack.c.b16 %v276, %v275
    %v352 = vpack.c.b16 %v278, %v277
    %v353 = vpack.c.b16 %v280, %v279
    %v354 = vpack.c.b16 %v282, %v281
    %v355 = vpack.c.b16 %v284, %v283
    %v356 = vpack.c.b16 %v286, %v285
    %v357 = vpack.c.b16 %v288, %v287
    %v358 = vpack.c.b16 %v290, %v289
    %v359 = vpack.c.b16 %v292, %v291
    %v360 = vpack.c.b16 %v294, %v293
    %v361 = vpack.c.b16 %v296, %v295
    %v362 = vpack.c.b16 %v298, %v297
    %v363 = vpack.c.b16 %v300, %v299
    %v364 = vpack.c.b16 %v302, %v301
    %v365 = vpack.c.b16 %v304, %v303
    %v366 = vpack.c.b16 %v306, %v305
    %v367 = vpack.c.b16 %v308, %v307
    %v368 = vpack.c.b16 %v310, %v309
    %v369 = vpack.c.b16 %v312, %v311
    %v370 = vpack.c.b16 %v314, %v313
    %v371 = vpack.c.b16 %v316, %v315
    %v372 = vpack.c.b16 %v318, %v317
    %v373 = vpack.c.b16 %v320, %v319
    %v374 = vpack.c.b16 %v322, %v321
    %v375 = vpack.c.b16 %v324, %v323
    %v376 = vpack.c.b16 %v326, %v325
    %v377 = vpack.c.b16 %v328, %v327
    %v378 = vpack.c.b16 %v330, %v329
    %427 = vmatpush.bf16.msra.mxu0 %v338
    %428 = vmatpush.bf16.msra.mxu0 %v337
    %429 = vmatpush.bf16.msra.mxu0 %v336
    %430 = vmatpush.bf16.msra.mxu0 %v335
    %431 = vmatpush.bf16.msra.mxu0 %v334
    %432 = vmatpush.bf16.msra.mxu0 %v333
    %433 = vmatpush.bf16.msra.mxu0 %v332
    %434 = vmatpush.bf16.msra.mxu0 %v331
    %435 = vmatmul.bf16.gmra.mxu0 %v127
    %v436 = vpop.f32.mrf.mxu0
    %v437 = vadd.f32 %v116, %v436
    %v438 = vpop.f32.mrf.mxu0
    %439 = vdwg.mxu0
    %440 = vmatpush.bf16.msra.mxu0 %v346
    %441 = vmatpush.bf16.msra.mxu0 %v345
    %442 = vmatpush.bf16.msra.mxu0 %v344
    %443 = vmatpush.bf16.msra.mxu0 %v343
    %444 = vmatpush.bf16.msra.mxu0 %v342
    %445 = vmatpush.bf16.msra.mxu0 %v341
    %446 = vmatpush.bf16.msra.mxu0 %v340
    %447 = vmatpush.bf16.msra.mxu0 %v339
    %448 = vmatmul.bf16.gmra.mxu0 %v128
    %v449 = vpop.f32.mrf.mxu0
    %v450 = vadd.f32 %v437, %v449
    %v451 = vpop.f32.mrf.mxu0
    %452 = vdwg.mxu0
    %453 = vmatpush.bf16.msra.mxu0 %v354
    %454 = vmatpush.bf16.msra.mxu0 %v353
    %455 = vmatpush.bf16.msra.mxu0 %v352
    %456 = vmatpush.bf16.msra.mxu0 %v351
    %457 = vmatpush.bf16.msra.mxu0 %v350
    %458 = vmatpush.bf16.msra.mxu0 %v349
    %459 = vmatpush.bf16.msra.mxu0 %v348
    %460 = vmatpush.bf16.msra.mxu0 %v347
    %461 = vmatmul.bf16.gmra.mxu0 %v129
    %v462 = vpop.f32.mrf.mxu0
    %v463 = vadd.f32 %v450, %v462
    %v464 = vpop.f32.mrf.mxu0
    %465 = vdwg.mxu0
    %466 = vmatpush.bf16.msra.mxu0 %v362
    %467 = vmatpush.bf16.msra.mxu0 %v361
    %468 = vmatpush.bf16.msra.mxu0 %v360
    %469 = vmatpush.bf16.msra.mxu0 %v359
    %470 = vmatpush.bf16.msra.mxu0 %v358
    %471 = vmatpush.bf16.msra.mxu0 %v357
    %472 = vmatpush.bf16.msra.mxu0 %v356
    %473 = vmatpush.bf16.msra.mxu0 %v355
    %474 = vmatmul.bf16.gmra.mxu0 %v130
    %v475 = vpop.f32.mrf.mxu0
    %v476 = vadd.f32 %v463, %v475
    %v477 = vpop.f32.mrf.mxu0
    %478 = vdwg.mxu0
    %479 = vmatpush.bf16.msra.mxu0 %v370
    %480 = vmatpush.bf16.msra.mxu0 %v369
    %481 = vmatpush.bf16.msra.mxu0 %v368
    %482 = vmatpush.bf16.msra.mxu0 %v367
    %483 = vmatpush.bf16.msra.mxu0 %v366
    %484 = vmatpush.bf16.msra.mxu0 %v365
    %485 = vmatpush.bf16.msra.mxu0 %v364
    %486 = vmatpush.bf16.msra.mxu0 %v363
    %487 = vmatmul.bf16.gmra.mxu0 %v131
    %v488 = vpop.f32.mrf.mxu0
    %v489 = vadd.f32 %v476, %v488
    %v490 = vpop.f32.mrf.mxu0
    %491 = vdwg.mxu0
    %492 = vmatpush.bf16.msra.mxu0 %v378
    %493 = vmatpush.bf16.msra.mxu0 %v377
    %494 = vmatpush.bf16.msra.mxu0 %v376
    %495 = vmatpush.bf16.msra.mxu0 %v375
    %496 = vmatpush.bf16.msra.mxu0 %v374
    %497 = vmatpush.bf16.msra.mxu0 %v373
    %498 = vmatpush.bf16.msra.mxu0 %v372
    %499 = vmatpush.bf16.msra.mxu0 %v371
    %500 = vmatmul.bf16.gmra.mxu0 %v132
    %v501 = vpop.f32.mrf.mxu0
    %v502 = vadd.f32 %v489, %v501
    %v503 = vpop.f32.mrf.mxu0
    %504 = vdwg.mxu0
    %vm505 = vcmask 523264
    %506 = vst.msk [vmem:[#allocation2] sm:$0xff] %vm505, %v502
    // Predicated region
    $region14: #{tpu_custom_call.1} parent=1 // pred_check
      _
    $region15: #{tpu_custom_call.1} parent=1 // pred_check_branch
      %508 = sbr.rel (0) target = $region17
    $region16: #{tpu_custom_call.1} parent=1 // pred_region
      %510 = vsyncadd [#allocation3], 0
      %s512 = sshll.u32 [#allocation2], 4
      %s513 = int_to_ptr.vmem [resolvable:$true] %s512
      %s514 = sshll.u32 %s3, 4
      %s515 = int_to_ptr.hbm [resolvable:$true] %s514
      %517 = dma.vmem_to_hbm [thread:$0]  %s513, 128, %s515, [#allocation3]
    $region17: #{tpu_custom_call.1} parent=1 // pred_fallthru
      _
    // Predicated region
    $region18: #{tpu_custom_call.1} parent=1 // pred_check
      _
    $region19: #{tpu_custom_call.1} parent=1 // pred_check_branch
      %519 = sbr.rel (0) target = $region21
    $region20: #{tpu_custom_call.1} parent=1 // pred_region
      %521 = dma.done [#allocation3], 128
    $region21: #{tpu_custom_call.1} parent=1 // pred_fallthru
      _
    %522 = vsyncpa [#allocation3], 1

</llo_original>
